<compile_context>
chip_gen: v5e
topology: v5e:2x2
jax: 0.10.0
libtpu: 0.0.40
codegen_flags: <defaults>
</compile_context>

<pallas_src>
import jax
import jax.numpy as jnp
from jax import lax
from jax.experimental import pallas as pl
from jax.experimental.pallas import tpu as pltpu


def _round_up(x, m):
    return ((x + m - 1) // m) * m


def _make_kernel(ch, cout, tn, n_valid, n_pad, eps):
    """Build the kernel closure over static configuration."""
    inv_n = 1.0 / float(n_valid)
    need_mask = (n_pad != n_valid)

    def kernel(params_ref, up_ref, res_ref, o_ref, sum_ref, sq_ref):
        # params_ref : SMEM (1 + cout + 2*cout*ch,) f32
        #              [prelu_a, bias(cout), w_up(cout*ch), w_res(cout*ch)]
        # up_ref     : VMEM (1, ch, tn)    input tile (up half of concat)
        # res_ref    : VMEM (1, ch, tn)    input tile (res half of concat)
        # o_ref      : VMEM (1, cout, tn)  output tile
        # sum_ref    : VMEM (cout, tn) f32 running per-channel partial sums
        # sq_ref     : VMEM (cout, tn) f32 running per-channel partial sum-of-squares
        p = pl.program_id(1)   # pass: 0 = stats, 1 = normalize + write
        t = pl.program_id(2)   # spatial tile index

        # ---- pointwise conv as VPU broadcast-MACs (concat folded into split weights) ----
        up = up_ref[0].astype(jnp.float32)     # (ch, tn)
        res = res_ref[0].astype(jnp.float32)   # (ch, tn)
        up_rows = [up[ci:ci + 1, :] for ci in range(ch)]
        res_rows = [res[ci:ci + 1, :] for ci in range(ch)]

        b_off = 1
        wu_off = 1 + cout
        wr_off = 1 + cout + cout * ch
        rows = []
        for co in range(cout):
            acc = jnp.full((1, tn), params_ref[b_off + co], dtype=jnp.float32)
            for ci in range(ch):
                acc = acc + params_ref[wu_off + co * ch + ci] * up_rows[ci]
                acc = acc + params_ref[wr_off + co * ch + ci] * res_rows[ci]
            rows.append(acc)
        y = jnp.concatenate(rows, axis=0)      # (cout, tn) f32

        # ---- pass 0: accumulate per-channel sum / sum-of-squares across N tiles ----
        @pl.when(jnp.logical_and(p == 0, t == 0))
        def _():
            sum_ref[...] = jnp.zeros_like(sum_ref)
            sq_ref[...] = jnp.zeros_like(sq_ref)

        @pl.when(p == 0)
        def _():
            if need_mask:
                pos = t * tn + lax.broadcasted_iota(jnp.int32, (1, tn), 1)
                yv = jnp.where(pos < n_valid, y, 0.0)
            else:
                yv = y
            sum_ref[...] += yv
            sq_ref[...] += yv * yv

        # ---- pass 1: finalize stats, normalize + PReLU, store ----
        @pl.when(p == 1)
        def _():
            s1 = jnp.sum(sum_ref[...], axis=1, keepdims=True)   # (cout, 1)
            s2 = jnp.sum(sq_ref[...], axis=1, keepdims=True)    # (cout, 1)
            mean = s1 * inv_n
            var = jnp.maximum(s2 * inv_n - mean * mean, 0.0)    # clamp f32 cancellation
            scale = lax.rsqrt(var + eps)
            yn = (y - mean) * scale
            a = params_ref[0]
            o_ref[0] = jnp.where(yn > 0, yn, a * yn).astype(o_ref.dtype)

    return kernel


def up_concat_forward(up_x, res_x, conv_w, conv_b, prelu_a, *, tile_n=512, eps=1e-5):
    """up_x, res_x: [B, C_half, D, H, W] (NCDHW).  conv_w: [Cout, Cin, 1, 1, 1],
    conv_b: [Cout], prelu_a: scalar.  Returns [B, Cout, D, H, W]."""
    B, Ch, D, H, W = up_x.shape
    Cout, Cin = conv_w.shape[0], conv_w.shape[1]
    assert Cin == 2 * Ch and Cout == Cin // 2
    N = D * H * W

    # Native layout [B, C, N]: spatial on the lane axis, reshapes are free.
    up_r = up_x.reshape(B, Ch, N)
    res_r = res_x.reshape(B, Ch, N)

    tn = min(_round_up(tile_n, 128), _round_up(N, 128))
    n_pad = _round_up(N, tn)
    nt = n_pad // tn
    if n_pad != N:
        pad = ((0, 0), (0, 0), (0, n_pad - N))
        up_r = jnp.pad(up_r, pad)
        res_r = jnp.pad(res_r, pad)

    # Fold the channel concat into split weights; pack every scalar param into
    # one small SMEM-resident vector (no lane-wasteful VMEM vregs / DMAs).
    w2 = conv_w.reshape(Cout, Cin).astype(jnp.float32)
    params = jnp.concatenate([
        jnp.asarray(prelu_a, jnp.float32).reshape(1),
        conv_b.astype(jnp.float32).reshape(Cout),
        w2[:, :Ch].reshape(Cout * Ch),    # weights applied to the up_x half
        w2[:, Ch:].reshape(Cout * Ch),    # weights applied to the res_x half
    ])

    kernel = _make_kernel(Ch, Cout, tn, N, n_pad, eps)

    out = pl.pallas_call(
        kernel,
        out_shape=jax.ShapeDtypeStruct((B, Cout, n_pad), up_x.dtype),
        grid_spec=pltpu.PrefetchScalarGridSpec(
            num_scalar_prefetch=0,
            grid=(B, 2, nt),                                   # (batch, pass, N tile)
            in_specs=[
                pl.BlockSpec(memory_space=pltpu.MemorySpace.SMEM),       # packed params
                pl.BlockSpec((1, Ch, tn), lambda b, p, t: (b, 0, t)),    # up tile
                pl.BlockSpec((1, Ch, tn), lambda b, p, t: (b, 0, t)),    # res tile
            ],
            # During the stats pass (p=0) the output block index stays pinned at
            # (b,0,0), so no garbage tiles are ever written back; pass 1 writes
            # each tile exactly once.
            out_specs=pl.BlockSpec((1, Cout, tn), lambda b, p, t: (b, 0, t * p)),
            scratch_shapes=[
                pltpu.VMEM((Cout, tn), jnp.float32),   # running per-channel sum
                pltpu.VMEM((Cout, tn), jnp.float32),   # running per-channel sum of squares
            ],
        ),
        compiler_params=pltpu.CompilerParams(
            dimension_semantics=("parallel", "arbitrary", "arbitrary")),
    )(params, up_r, res_r)

    if n_pad != N:
        out = out[:, :, :N]
    return out.reshape(B, Cout, D, H, W)


if __name__ == "__main__":
    key = jax.random.PRNGKey(0)
    k_up, k_res, k_w, k_b = jax.random.split(key, 4)

    # Up_Concat(in_channels=8): each input carries 4 channels, output has 4.
    B, Ch, D, H, W = 2, 4, 4, 8, 8
    Cin, Cout = 2 * Ch, Ch

    up_x = jax.random.normal(k_up, (B, Ch, D, H, W), dtype=jnp.float32)
    res_x = jax.random.normal(k_res, (B, Ch, D, H, W), dtype=jnp.float32)

    # Deterministic synthetic parameters (Conv3d k=1 weight + bias, PReLU slope)
    conv_w = jax.random.normal(k_w, (Cout, Cin, 1, 1, 1), dtype=jnp.float32) * 0.1
    conv_b = jax.random.normal(k_b, (Cout,), dtype=jnp.float32) * 0.1
    prelu_a = jnp.array(0.2, dtype=jnp.float32)

    # small tile so the demo exercises cross-tile stats accumulation (N=256 -> 2 tiles)
    out = up_concat_forward(up_x, res_x, conv_w, conv_b, prelu_a, tile_n=128)
    jax.block_until_ready(out)

    # pure-JAX reference
    x_cat = jnp.concatenate([up_x, res_x], axis=1)                     # [B, Cin, D, H, W]
    w2 = conv_w.reshape(Cout, Cin)
    y_ref = jnp.einsum('bcdhw,oc->bodhw', x_cat, w2) + conv_b[None, :, None, None, None]
    mean = y_ref.mean(axis=(2, 3, 4), keepdims=True)
    var = ((y_ref - mean) ** 2).mean(axis=(2, 3, 4), keepdims=True)
    y_n = (y_ref - mean) * lax.rsqrt(var + 1e-5)
    ref = jnp.where(y_n > 0, y_n, 0.2 * y_n)

    assert out.shape == (B, Cout, D, H, W)
    err = float(jnp.max(jnp.abs(out - ref)))
    assert err < 1e-3, f"max abs err {err}"
    print("KERNEL_OK")
</pallas_src>

<mosaic_0001>
module attributes {stable_mosaic.version = 11 : i64} {
  func.func @kernel(%arg0: i32, %arg1: i32, %arg2: i32, %arg3: memref<37xf32, #tpu.memory_space<smem>>, %arg4: memref<1x4x128xf32, #tpu.memory_space<vmem>>, %arg5: memref<1x4x128xf32, #tpu.memory_space<vmem>>, %arg6: memref<1x4x128xf32, #tpu.memory_space<vmem>>, %arg7: memref<4x128xf32, #tpu.memory_space<vmem>>, %arg8: memref<4x128xf32, #tpu.memory_space<vmem>>) attributes {dimension_semantics = [#tpu.dimension_semantics<parallel>, #tpu.dimension_semantics<arbitrary>, #tpu.dimension_semantics<arbitrary>], iteration_bounds = array<i64: 2, 2, 2>, scalar_prefetch = 0 : i64, scratch_operands = 2 : i64, tpu.core_type = #tpu.core_type<tc>, window_params = [{transform_indices = @transform_0, window_bounds = array<i64: 37>}, {transform_indices = @transform_1, window_bounds = array<i64: 1, 4, 128>}, {transform_indices = @transform_2, window_bounds = array<i64: 1, 4, 128>}, {transform_indices = @transform_3, window_bounds = array<i64: 1, 4, 128>}]} {
    %c0 = arith.constant 0 : index
    %c0_0 = arith.constant 0 : index
    %c0_1 = arith.constant 0 : index
    %0 = vector.load %arg4[%c0, %c0_0, %c0_1] : memref<1x4x128xf32, #tpu.memory_space<vmem>>, vector<1x4x128xf32>
    %1 = vector.shape_cast %0 : vector<1x4x128xf32> to vector<4x128xf32>
    %c0_2 = arith.constant 0 : index
    %c0_3 = arith.constant 0 : index
    %c0_4 = arith.constant 0 : index
    %2 = vector.load %arg5[%c0_2, %c0_3, %c0_4] : memref<1x4x128xf32, #tpu.memory_space<vmem>>, vector<1x4x128xf32>
    %3 = vector.shape_cast %2 : vector<1x4x128xf32> to vector<4x128xf32>
    %4 = vector.extract_strided_slice %1 {offsets = [0, 0], sizes = [1, 128], strides = [1, 1]} : vector<4x128xf32> to vector<1x128xf32>
    %5 = vector.extract_strided_slice %1 {offsets = [1, 0], sizes = [1, 128], strides = [1, 1]} : vector<4x128xf32> to vector<1x128xf32>
    %6 = vector.extract_strided_slice %1 {offsets = [2, 0], sizes = [1, 128], strides = [1, 1]} : vector<4x128xf32> to vector<1x128xf32>
    %7 = vector.extract_strided_slice %1 {offsets = [3, 0], sizes = [1, 128], strides = [1, 1]} : vector<4x128xf32> to vector<1x128xf32>
    %8 = vector.extract_strided_slice %3 {offsets = [0, 0], sizes = [1, 128], strides = [1, 1]} : vector<4x128xf32> to vector<1x128xf32>
    %9 = vector.extract_strided_slice %3 {offsets = [1, 0], sizes = [1, 128], strides = [1, 1]} : vector<4x128xf32> to vector<1x128xf32>
    %10 = vector.extract_strided_slice %3 {offsets = [2, 0], sizes = [1, 128], strides = [1, 1]} : vector<4x128xf32> to vector<1x128xf32>
    %11 = vector.extract_strided_slice %3 {offsets = [3, 0], sizes = [1, 128], strides = [1, 1]} : vector<4x128xf32> to vector<1x128xf32>
    %c1 = arith.constant 1 : index
    %12 = memref.load %arg3[%c1] : memref<37xf32, #tpu.memory_space<smem>>
    %13 = vector.broadcast %12 : f32 to vector<1x128xf32>
    %c5 = arith.constant 5 : index
    %14 = memref.load %arg3[%c5] : memref<37xf32, #tpu.memory_space<smem>>
    %15 = vector.broadcast %14 : f32 to vector<1x128xf32>
    %16 = arith.mulf %15, %4 : vector<1x128xf32>
    %17 = arith.addf %13, %16 : vector<1x128xf32>
    %c21 = arith.constant 21 : index
    %18 = memref.load %arg3[%c21] : memref<37xf32, #tpu.memory_space<smem>>
    %19 = vector.broadcast %18 : f32 to vector<1x128xf32>
    %20 = arith.mulf %19, %8 : vector<1x128xf32>
    %21 = arith.addf %17, %20 : vector<1x128xf32>
    %c6 = arith.constant 6 : index
    %22 = memref.load %arg3[%c6] : memref<37xf32, #tpu.memory_space<smem>>
    %23 = vector.broadcast %22 : f32 to vector<1x128xf32>
    %24 = arith.mulf %23, %5 : vector<1x128xf32>
    %25 = arith.addf %21, %24 : vector<1x128xf32>
    %c22 = arith.constant 22 : index
    %26 = memref.load %arg3[%c22] : memref<37xf32, #tpu.memory_space<smem>>
    %27 = vector.broadcast %26 : f32 to vector<1x128xf32>
    %28 = arith.mulf %27, %9 : vector<1x128xf32>
    %29 = arith.addf %25, %28 : vector<1x128xf32>
    %c7 = arith.constant 7 : index
    %30 = memref.load %arg3[%c7] : memref<37xf32, #tpu.memory_space<smem>>
    %31 = vector.broadcast %30 : f32 to vector<1x128xf32>
    %32 = arith.mulf %31, %6 : vector<1x128xf32>
    %33 = arith.addf %29, %32 : vector<1x128xf32>
    %c23 = arith.constant 23 : index
    %34 = memref.load %arg3[%c23] : memref<37xf32, #tpu.memory_space<smem>>
    %35 = vector.broadcast %34 : f32 to vector<1x128xf32>
    %36 = arith.mulf %35, %10 : vector<1x128xf32>
    %37 = arith.addf %33, %36 : vector<1x128xf32>
    %c8 = arith.constant 8 : index
    %38 = memref.load %arg3[%c8] : memref<37xf32, #tpu.memory_space<smem>>
    %39 = vector.broadcast %38 : f32 to vector<1x128xf32>
    %40 = arith.mulf %39, %7 : vector<1x128xf32>
    %41 = arith.addf %37, %40 : vector<1x128xf32>
    %c24 = arith.constant 24 : index
    %42 = memref.load %arg3[%c24] : memref<37xf32, #tpu.memory_space<smem>>
    %43 = vector.broadcast %42 : f32 to vector<1x128xf32>
    %44 = arith.mulf %43, %11 : vector<1x128xf32>
    %45 = arith.addf %41, %44 : vector<1x128xf32>
    %c2 = arith.constant 2 : index
    %46 = memref.load %arg3[%c2] : memref<37xf32, #tpu.memory_space<smem>>
    %47 = vector.broadcast %46 : f32 to vector<1x128xf32>
    %c9 = arith.constant 9 : index
    %48 = memref.load %arg3[%c9] : memref<37xf32, #tpu.memory_space<smem>>
    %49 = vector.broadcast %48 : f32 to vector<1x128xf32>
    %50 = arith.mulf %49, %4 : vector<1x128xf32>
    %51 = arith.addf %47, %50 : vector<1x128xf32>
    %c25 = arith.constant 25 : index
    %52 = memref.load %arg3[%c25] : memref<37xf32, #tpu.memory_space<smem>>
    %53 = vector.broadcast %52 : f32 to vector<1x128xf32>
    %54 = arith.mulf %53, %8 : vector<1x128xf32>
    %55 = arith.addf %51, %54 : vector<1x128xf32>
    %c10 = arith.constant 10 : index
    %56 = memref.load %arg3[%c10] : memref<37xf32, #tpu.memory_space<smem>>
    %57 = vector.broadcast %56 : f32 to vector<1x128xf32>
    %58 = arith.mulf %57, %5 : vector<1x128xf32>
    %59 = arith.addf %55, %58 : vector<1x128xf32>
    %c26 = arith.constant 26 : index
    %60 = memref.load %arg3[%c26] : memref<37xf32, #tpu.memory_space<smem>>
    %61 = vector.broadcast %60 : f32 to vector<1x128xf32>
    %62 = arith.mulf %61, %9 : vector<1x128xf32>
    %63 = arith.addf %59, %62 : vector<1x128xf32>
    %c11 = arith.constant 11 : index
    %64 = memref.load %arg3[%c11] : memref<37xf32, #tpu.memory_space<smem>>
    %65 = vector.broadcast %64 : f32 to vector<1x128xf32>
    %66 = arith.mulf %65, %6 : vector<1x128xf32>
    %67 = arith.addf %63, %66 : vector<1x128xf32>
    %c27 = arith.constant 27 : index
    %68 = memref.load %arg3[%c27] : memref<37xf32, #tpu.memory_space<smem>>
    %69 = vector.broadcast %68 : f32 to vector<1x128xf32>
    %70 = arith.mulf %69, %10 : vector<1x128xf32>
    %71 = arith.addf %67, %70 : vector<1x128xf32>
    %c12 = arith.constant 12 : index
    %72 = memref.load %arg3[%c12] : memref<37xf32, #tpu.memory_space<smem>>
    %73 = vector.broadcast %72 : f32 to vector<1x128xf32>
    %74 = arith.mulf %73, %7 : vector<1x128xf32>
    %75 = arith.addf %71, %74 : vector<1x128xf32>
    %c28 = arith.constant 28 : index
    %76 = memref.load %arg3[%c28] : memref<37xf32, #tpu.memory_space<smem>>
    %77 = vector.broadcast %76 : f32 to vector<1x128xf32>
    %78 = arith.mulf %77, %11 : vector<1x128xf32>
    %79 = arith.addf %75, %78 : vector<1x128xf32>
    %c3 = arith.constant 3 : index
    %80 = memref.load %arg3[%c3] : memref<37xf32, #tpu.memory_space<smem>>
    %81 = vector.broadcast %80 : f32 to vector<1x128xf32>
    %c13 = arith.constant 13 : index
    %82 = memref.load %arg3[%c13] : memref<37xf32, #tpu.memory_space<smem>>
    %83 = vector.broadcast %82 : f32 to vector<1x128xf32>
    %84 = arith.mulf %83, %4 : vector<1x128xf32>
    %85 = arith.addf %81, %84 : vector<1x128xf32>
    %c29 = arith.constant 29 : index
    %86 = memref.load %arg3[%c29] : memref<37xf32, #tpu.memory_space<smem>>
    %87 = vector.broadcast %86 : f32 to vector<1x128xf32>
    %88 = arith.mulf %87, %8 : vector<1x128xf32>
    %89 = arith.addf %85, %88 : vector<1x128xf32>
    %c14 = arith.constant 14 : index
    %90 = memref.load %arg3[%c14] : memref<37xf32, #tpu.memory_space<smem>>
    %91 = vector.broadcast %90 : f32 to vector<1x128xf32>
    %92 = arith.mulf %91, %5 : vector<1x128xf32>
    %93 = arith.addf %89, %92 : vector<1x128xf32>
    %c30 = arith.constant 30 : index
    %94 = memref.load %arg3[%c30] : memref<37xf32, #tpu.memory_space<smem>>
    %95 = vector.broadcast %94 : f32 to vector<1x128xf32>
    %96 = arith.mulf %95, %9 : vector<1x128xf32>
    %97 = arith.addf %93, %96 : vector<1x128xf32>
    %c15 = arith.constant 15 : index
    %98 = memref.load %arg3[%c15] : memref<37xf32, #tpu.memory_space<smem>>
    %99 = vector.broadcast %98 : f32 to vector<1x128xf32>
    %100 = arith.mulf %99, %6 : vector<1x128xf32>
    %101 = arith.addf %97, %100 : vector<1x128xf32>
    %c31 = arith.constant 31 : index
    %102 = memref.load %arg3[%c31] : memref<37xf32, #tpu.memory_space<smem>>
    %103 = vector.broadcast %102 : f32 to vector<1x128xf32>
    %104 = arith.mulf %103, %10 : vector<1x128xf32>
    %105 = arith.addf %101, %104 : vector<1x128xf32>
    %c16 = arith.constant 16 : index
    %106 = memref.load %arg3[%c16] : memref<37xf32, #tpu.memory_space<smem>>
    %107 = vector.broadcast %106 : f32 to vector<1x128xf32>
    %108 = arith.mulf %107, %7 : vector<1x128xf32>
    %109 = arith.addf %105, %108 : vector<1x128xf32>
    %c32 = arith.constant 32 : index
    %110 = memref.load %arg3[%c32] : memref<37xf32, #tpu.memory_space<smem>>
    %111 = vector.broadcast %110 : f32 to vector<1x128xf32>
    %112 = arith.mulf %111, %11 : vector<1x128xf32>
    %113 = arith.addf %109, %112 : vector<1x128xf32>
    %c4 = arith.constant 4 : index
    %114 = memref.load %arg3[%c4] : memref<37xf32, #tpu.memory_space<smem>>
    %115 = vector.broadcast %114 : f32 to vector<1x128xf32>
    %c17 = arith.constant 17 : index
    %116 = memref.load %arg3[%c17] : memref<37xf32, #tpu.memory_space<smem>>
    %117 = vector.broadcast %116 : f32 to vector<1x128xf32>
    %118 = arith.mulf %117, %4 : vector<1x128xf32>
    %119 = arith.addf %115, %118 : vector<1x128xf32>
    %c33 = arith.constant 33 : index
    %120 = memref.load %arg3[%c33] : memref<37xf32, #tpu.memory_space<smem>>
    %121 = vector.broadcast %120 : f32 to vector<1x128xf32>
    %122 = arith.mulf %121, %8 : vector<1x128xf32>
    %123 = arith.addf %119, %122 : vector<1x128xf32>
    %c18 = arith.constant 18 : index
    %124 = memref.load %arg3[%c18] : memref<37xf32, #tpu.memory_space<smem>>
    %125 = vector.broadcast %124 : f32 to vector<1x128xf32>
    %126 = arith.mulf %125, %5 : vector<1x128xf32>
    %127 = arith.addf %123, %126 : vector<1x128xf32>
    %c34 = arith.constant 34 : index
    %128 = memref.load %arg3[%c34] : memref<37xf32, #tpu.memory_space<smem>>
    %129 = vector.broadcast %128 : f32 to vector<1x128xf32>
    %130 = arith.mulf %129, %9 : vector<1x128xf32>
    %131 = arith.addf %127, %130 : vector<1x128xf32>
    %c19 = arith.constant 19 : index
    %132 = memref.load %arg3[%c19] : memref<37xf32, #tpu.memory_space<smem>>
    %133 = vector.broadcast %132 : f32 to vector<1x128xf32>
    %134 = arith.mulf %133, %6 : vector<1x128xf32>
    %135 = arith.addf %131, %134 : vector<1x128xf32>
    %c35 = arith.constant 35 : index
    %136 = memref.load %arg3[%c35] : memref<37xf32, #tpu.memory_space<smem>>
    %137 = vector.broadcast %136 : f32 to vector<1x128xf32>
    %138 = arith.mulf %137, %10 : vector<1x128xf32>
    %139 = arith.addf %135, %138 : vector<1x128xf32>
    %c20 = arith.constant 20 : index
    %140 = memref.load %arg3[%c20] : memref<37xf32, #tpu.memory_space<smem>>
    %141 = vector.broadcast %140 : f32 to vector<1x128xf32>
    %142 = arith.mulf %141, %7 : vector<1x128xf32>
    %143 = arith.addf %139, %142 : vector<1x128xf32>
    %c36 = arith.constant 36 : index
    %144 = memref.load %arg3[%c36] : memref<37xf32, #tpu.memory_space<smem>>
    %145 = vector.broadcast %144 : f32 to vector<1x128xf32>
    %146 = arith.mulf %145, %11 : vector<1x128xf32>
    %147 = arith.addf %143, %146 : vector<1x128xf32>
    %148 = tpu.concatenate %45, %79, %113, %147 in 0 : vector<1x128xf32>, vector<1x128xf32>, vector<1x128xf32>, vector<1x128xf32> -> vector<4x128xf32>
    %c0_i32 = arith.constant 0 : i32
    %149 = arith.cmpi eq, %arg1, %c0_i32 : i32
    %c0_i32_5 = arith.constant 0 : i32
    %150 = arith.cmpi eq, %arg2, %c0_i32_5 : i32
    %151 = arith.andi %149, %150 : i1
    %152 = arith.extui %151 : i1 to i32
    %c0_i32_6 = arith.constant 0 : i32
    %153 = arith.cmpi ne, %152, %c0_i32_6 : i32
    scf.if %153 {
      %cst = arith.constant 0.000000e+00 : f32
      %160 = vector.broadcast %cst : f32 to vector<4x128xf32>
      %c0_10 = arith.constant 0 : index
      %c0_11 = arith.constant 0 : index
      %161 = vector.load %arg7[%c0_10, %c0_11] : memref<4x128xf32, #tpu.memory_space<vmem>>, vector<4x128xf32>
      tpu.vector_store %arg7[%c0_10, %c0_11], %160 {strides = array<i32>} : memref<4x128xf32, #tpu.memory_space<vmem>>, vector<4x128xf32>,
      %cst_12 = arith.constant 0.000000e+00 : f32
      %162 = vector.broadcast %cst_12 : f32 to vector<4x128xf32>
      %c0_13 = arith.constant 0 : index
      %c0_14 = arith.constant 0 : index
      %163 = vector.load %arg8[%c0_13, %c0_14] : memref<4x128xf32, #tpu.memory_space<vmem>>, vector<4x128xf32>
      tpu.vector_store %arg8[%c0_13, %c0_14], %162 {strides = array<i32>} : memref<4x128xf32, #tpu.memory_space<vmem>>, vector<4x128xf32>,
    } else {
    }
    %c0_i32_7 = arith.constant 0 : i32
    %154 = arith.cmpi eq, %arg1, %c0_i32_7 : i32
    %155 = arith.extui %154 : i1 to i32
    %c0_i32_8 = arith.constant 0 : i32
    %156 = arith.cmpi ne, %155, %c0_i32_8 : i32
    scf.if %156 {
      %c0_10 = arith.constant 0 : index
      %c0_11 = arith.constant 0 : index
      %160 = vector.load %arg7[%c0_10, %c0_11] : memref<4x128xf32, #tpu.memory_space<vmem>>, vector<4x128xf32>
      %161 = arith.addf %160, %148 : vector<4x128xf32>
      %c0_12 = arith.constant 0 : index
      %c0_13 = arith.constant 0 : index
      %162 = vector.load %arg7[%c0_12, %c0_13] : memref<4x128xf32, #tpu.memory_space<vmem>>, vector<4x128xf32>
      tpu.vector_store %arg7[%c0_12, %c0_13], %161 {strides = array<i32>} : memref<4x128xf32, #tpu.memory_space<vmem>>, vector<4x128xf32>,
      %c0_14 = arith.constant 0 : index
      %c0_15 = arith.constant 0 : index
      %163 = vector.load %arg8[%c0_14, %c0_15] : memref<4x128xf32, #tpu.memory_space<vmem>>, vector<4x128xf32>
      %164 = arith.mulf %148, %148 : vector<4x128xf32>
      %165 = arith.addf %163, %164 : vector<4x128xf32>
      %c0_16 = arith.constant 0 : index
      %c0_17 = arith.constant 0 : index
      %166 = vector.load %arg8[%c0_16, %c0_17] : memref<4x128xf32, #tpu.memory_space<vmem>>, vector<4x128xf32>
      tpu.vector_store %arg8[%c0_16, %c0_17], %165 {strides = array<i32>} : memref<4x128xf32, #tpu.memory_space<vmem>>, vector<4x128xf32>,
    } else {
    }
    %c1_i32 = arith.constant 1 : i32
    %157 = arith.cmpi eq, %arg1, %c1_i32 : i32
    %158 = arith.extui %157 : i1 to i32
    %c0_i32_9 = arith.constant 0 : i32
    %159 = arith.cmpi ne, %158, %c0_i32_9 : i32
    scf.if %159 {
      %c0_10 = arith.constant 0 : index
      %c0_11 = arith.constant 0 : index
      %160 = vector.load %arg7[%c0_10, %c0_11] : memref<4x128xf32, #tpu.memory_space<vmem>>, vector<4x128xf32>
      %cst = arith.constant dense<0.000000e+00> : vector<4xf32>
      %161 = vector.multi_reduction <add>, %160, %cst [1] : vector<4x128xf32> to vector<4xf32>
      %162 = vector.shape_cast %161 : vector<4xf32> to vector<4x1xf32>
      %c0_12 = arith.constant 0 : index
      %c0_13 = arith.constant 0 : index
      %163 = vector.load %arg8[%c0_12, %c0_13] : memref<4x128xf32, #tpu.memory_space<vmem>>, vector<4x128xf32>
      %cst_14 = arith.constant dense<0.000000e+00> : vector<4xf32>
      %164 = vector.multi_reduction <add>, %163, %cst_14 [1] : vector<4x128xf32> to vector<4xf32>
      %165 = vector.shape_cast %164 : vector<4xf32> to vector<4x1xf32>
      %cst_15 = arith.constant 3.906250e-03 : f32
      %166 = vector.broadcast %cst_15 : f32 to vector<4x1xf32>
      %167 = arith.mulf %162, %166 : vector<4x1xf32>
      %cst_16 = arith.constant 3.906250e-03 : f32
      %168 = vector.broadcast %cst_16 : f32 to vector<4x1xf32>
      %169 = arith.mulf %165, %168 : vector<4x1xf32>
      %170 = arith.mulf %167, %167 : vector<4x1xf32>
      %171 = arith.subf %169, %170 : vector<4x1xf32>
      %cst_17 = arith.constant 0.000000e+00 : f32
      %172 = vector.broadcast %cst_17 : f32 to vector<4x1xf32>
      %173 = arith.maximumf %171, %172 : vector<4x1xf32>
      %cst_18 = arith.constant 9.99999974E-6 : f32
      %174 = vector.broadcast %cst_18 : f32 to vector<4x1xf32>
      %175 = arith.addf %173, %174 : vector<4x1xf32>
      %176 = math.rsqrt %175 : vector<4x1xf32>
      %177 = vector.broadcast %167 : vector<4x1xf32> to vector<4x128xf32>
      %178 = arith.subf %148, %177 : vector<4x128xf32>
      %179 = vector.broadcast %176 : vector<4x1xf32> to vector<4x128xf32>
      %180 = arith.mulf %178, %179 : vector<4x128xf32>
      %c0_19 = arith.constant 0 : index
      %181 = memref.load %arg3[%c0_19] : memref<37xf32, #tpu.memory_space<smem>>
      %cst_20 = arith.constant 0.000000e+00 : f32
      %182 = vector.broadcast %cst_20 : f32 to vector<4x128xf32>
      %183 = arith.cmpf ogt, %180, %182 : vector<4x128xf32>
      %184 = vector.broadcast %181 : f32 to vector<4x128xf32>
      %185 = arith.mulf %184, %180 : vector<4x128xf32>
      %186 = arith.select %183, %180, %185 : vector<4x128xi1>, vector<4x128xf32>
      %c0_21 = arith.constant 0 : index
      %c0_22 = arith.constant 0 : index
      %c0_23 = arith.constant 0 : index
      %187 = vector.load %arg6[%c0_21, %c0_22, %c0_23] : memref<1x4x128xf32, #tpu.memory_space<vmem>>, vector<1x4x128xf32>
      %188 = vector.shape_cast %187 : vector<1x4x128xf32> to vector<4x128xf32>
      %189 = vector.shape_cast %186 : vector<4x128xf32> to vector<1x4x128xf32>
      tpu.vector_store %arg6[%c0_21, %c0_22, %c0_23], %189 {strides = array<i32>} : memref<1x4x128xf32, #tpu.memory_space<vmem>>, vector<1x4x128xf32>,
    } else {
    }
    return
  }
  func.func @transform_0(%arg0: i32, %arg1: i32, %arg2: i32) -> i32 {
    %c0_i32 = arith.constant 0 : i32
    %c0_i32_0 = arith.constant 0 : i32
    return %c0_i32 : i32
  }
  func.func @transform_1(%arg0: i32, %arg1: i32, %arg2: i32) -> (i32, i32, i32) {
    %c0_i32 = arith.constant 0 : i32
    %c0_i32_0 = arith.constant 0 : i32
    return %arg0, %c0_i32, %arg2 : i32, i32, i32
  }
  func.func @transform_2(%arg0: i32, %arg1: i32, %arg2: i32) -> (i32, i32, i32) {
    %c0_i32 = arith.constant 0 : i32
    %c0_i32_0 = arith.constant 0 : i32
    return %arg0, %c0_i32, %arg2 : i32, i32, i32
  }
  func.func @transform_3(%arg0: i32, %arg1: i32, %arg2: i32) -> (i32, i32, i32) {
    %0 = arith.muli %arg2, %arg1 : i32
    %c0_i32 = arith.constant 0 : i32
    %c0_i32_0 = arith.constant 0 : i32
    return %arg0, %c0_i32, %0 : i32, i32, i32
  }
}

</mosaic_0001>

<llo_original>
// kernel: tpu_custom_call.1
$region0: #{tpu_custom_call.1}
  #allocation0 [shape = 'u32[]', space=smem, size = 0x4, offset = 0x4, fixed_abs, tag = 'smem constant byte address 0x4 - core index']
  #allocation1 [shape = 'u32[72,128]{1,0:T(1,128)}', space=vmem, size = 0x9000, scoped, tag = 'internal scratch']
  #allocation2 [shape = 'f32[4,128]{1,0:T(4,128)}', space=vmem, size = 0x800, scoped, tag = 'scratch operand']
  #allocation3 [shape = 'f32[4,128]{1,0:T(4,128)}', space=vmem, size = 0x800, scoped, tag = 'scratch operand']
  %s0 = inlined_call_operand.hbm [shape: f32[37], index: 0, kind: input, shape index: {}]
  %s1 = inlined_call_operand.hbm [shape: f32[2,4,256], index: 1, kind: input, shape index: {}]
  %s2 = inlined_call_operand.hbm [shape: f32[2,4,256], index: 2, kind: input, shape index: {}]
  %s3 = inlined_call_operand.hbm [shape: f32[2,4,256], index: 3, kind: output, shape index: {}]
  %s4 = sld [smem:[#allocation0]]
  $region69: #{tpu_custom_call.1} parent=0
    _
  %s6 = ssub.s32 1, %s4
  %s7 = scalar_select 0, %s6, %s4
  $region1: #{tpu_custom_call.1} parent=0
    #allocation4 [shape = 'u8[512]{0}', space=smem, size = 0x200, scoped, tag = 'input window, operand 0, single buffered']
    #allocation5 [shape = 's32[2]{0}', space=sflag, size = 0x8, scoped, tag = 'scoped memory for tpu_custom_call.1']
    #allocation6 [shape = 's32[2]{0}', space=sflag, size = 0x8, scoped, tag = 'scoped memory for tpu_custom_call.1']
    #allocation7 [shape = 's32[2]{0}', space=sflag, size = 0x8, scoped, tag = 'scoped memory for tpu_custom_call.1']
    #allocation8 [shape = 'u8[4096]{0}', space=vmem, size = 0x1000, scoped, tag = 'input window, operand 1']
    #allocation9 [shape = 'u8[4096]{0}', space=vmem, size = 0x1000, scoped, tag = 'input window, operand 2']
    #allocation10 [shape = 's32[2]{0}', space=sflag, size = 0x8, scoped, tag = 'scoped memory for tpu_custom_call.1']
    #allocation11 [shape = 'u8[4096]{0}', space=vmem, size = 0x1000, scoped, tag = 'output window, operand 0']
    %8 = vsyncpa [#allocation7], 0
    %9 = vsyncpa [#allocation5], 0
    %s10 = scalar_lea.sflag [#allocation5], 1
    %11 = vsyncpa %s10, 0
    %12 = vsyncpa [#allocation10], 0
    %s13 = scalar_lea.sflag [#allocation10], 1
    %14 = vsyncpa %s13, 0
    %15 = vsyncpa [#allocation6], 0
    %s16 = scalar_lea.sflag [#allocation6], 1
    %17 = vsyncpa %s16, 0
    loop: start=0, step=1, limit=10
    $region2: #{tpu_custom_call.1} parent=1 // loop_pre_header
      _
    $region3: #{tpu_custom_call.1} parent=1 // loop_header
      %s19 = sphi 0, %s23
      %p20 = scmp.ge.s32.totalorder %s19, 10
      %s26 = sphi 0, %s45
      %s27 = sphi 0, %s41
      %s28 = sphi 0, %s37
      %s29 = sphi 0, %s26
      %s30 = sphi 0, %s27
      %s31 = sphi 0, %s28
      %s32 = sphi 0, %s29
      %s33 = sphi 0, %s30
      %s34 = sphi 0, %s31
      %s46 = sphi 0, %s46
      %s48 = sphi 0, %s46
      %s49 = sphi 0, %s48
      %s63 = sphi 0, %s49
      %s71 = sphi 0, %s73
      %s74 = sphi 0, %s71
      %s75 = sphi 0, %s74
      %s91 = sphi 0, %s75
      %s99 = sphi 0, %s101
      %s102 = sphi 0, %s99
      %s103 = sphi 0, %s102
      %s119 = sphi 0, %s103
      %s129 = sphi 0, %s131
      %s132 = sphi 0, %s129
      %s133 = sphi 0, %s132
      %s149 = sphi 0, %s133
    $region4: #{tpu_custom_call.1} parent=1 // loop_header_branch
      %22 = sbr.rel (%p20) target = $region8
    $region5: #{tpu_custom_call.1} parent=1 // loop_body
      %s24 = ssub.s32 %s19, 1
      %s25 = ssub.s32 %s19, 2
      %s35 = sadd.s32 1, %s28
      %p36 = scmp.ge.s32.totalorder %s35, 2
      %s37 = scalar_select %p36, 0, %s35
      %s38 = sadd.s32 1, %s27
      %s39 = scalar_select %p36, %s38, %s27
      %p40 = scmp.ge.s32.totalorder %s39, 2
      %s41 = scalar_select %p40, 0, %s39
      %s42 = sadd.s32 1, %s26
      %s43 = scalar_select %p40, %s42, %s26
      %p44 = scmp.ge.s32.totalorder %s43, 2
      %s45 = scalar_select %p44, 0, %s43
      %s47 = sadd.s32 %s46, 1
      %p50 = scmp.eq.s32.totalorder %s19, 7
      %p51 = scmp.ne.s32.totalorder %s46, %s48
      %p52 = scmp.eq.s32.totalorder %s19, 0
      %p53 = por %p51, %p52
      %p54 = scmp.ne.s32.totalorder %s46, %s48
      %p55 = scmp.eq.s32.totalorder %s24, 7
      %p56 = por %p54, %p55
      %p57 = scmp.ne.s32.totalorder %s48, %s49
      %p58 = scmp.eq.s32.totalorder %s24, 0
      %p59 = por %p57, %p58
      %p60 = scmp.ne.s32.totalorder %s48, %s49
      %p61 = scmp.eq.s32.totalorder %s25, 7
      %p62 = por %p60, %p61
      %p64 = scmp.ne.s32.totalorder %s49, %s63
      %p65 = scmp.eq.s32.totalorder %s25, 0
      %p66 = por %p64, %p65
      %s67 = ssub.s32 %s26, %s45
      %s68 = ssub.s32 %s28, %s37
      %s69 = sor.u32 %s67, %s68
      %p70 = scmp.eq.s32.totalorder %s69, 0
      %s72 = sadd.s32 %s71, 1
      %s73 = scalar_select %p70, %s71, %s72
      %p76 = pneg %p70
      %p77 = scmp.eq.s32.totalorder %s19, 7
      %p78 = por %p76, %p77
      %p79 = scmp.ne.s32.totalorder %s71, %s74
      %p80 = scmp.eq.s32.totalorder %s19, 0
      %p81 = por %p79, %p80
      %p82 = scmp.ne.s32.totalorder %s71, %s74
      %p83 = scmp.eq.s32.totalorder %s24, 7
      %p84 = por %p82, %p83
      %p85 = scmp.ne.s32.totalorder %s74, %s75
      %p86 = scmp.eq.s32.totalorder %s24, 0
      %p87 = por %p85, %p86
      %p88 = scmp.ne.s32.totalorder %s74, %s75
      %p89 = scmp.eq.s32.totalorder %s25, 7
      %p90 = por %p88, %p89
      %p92 = scmp.ne.s32.totalorder %s75, %s91
      %p93 = scmp.eq.s32.totalorder %s25, 0
      %p94 = por %p92, %p93
      %s95 = ssub.s32 %s26, %s45
      %s96 = ssub.s32 %s28, %s37
      %s97 = sor.u32 %s95, %s96
      %p98 = scmp.eq.s32.totalorder %s97, 0
      %s100 = sadd.s32 %s99, 1
      %s101 = scalar_select %p98, %s99, %s100
      %p104 = pneg %p98
      %p105 = scmp.eq.s32.totalorder %s19, 7
      %p106 = por %p104, %p105
      %p107 = scmp.ne.s32.totalorder %s99, %s102
      %p108 = scmp.eq.s32.totalorder %s19, 0
      %p109 = por %p107, %p108
      %p110 = scmp.ne.s32.totalorder %s99, %s102
      %p111 = scmp.eq.s32.totalorder %s24, 7
      %p112 = por %p110, %p111
      %p113 = scmp.ne.s32.totalorder %s102, %s103
      %p114 = scmp.eq.s32.totalorder %s24, 0
      %p115 = por %p113, %p114
      %p116 = scmp.ne.s32.totalorder %s102, %s103
      %p117 = scmp.eq.s32.totalorder %s25, 7
      %p118 = por %p116, %p117
      %p120 = scmp.ne.s32.totalorder %s103, %s119
      %p121 = scmp.eq.s32.totalorder %s25, 0
      %p122 = por %p120, %p121
      %s123 = smul.u32 %s28, %s27
      %s124 = smul.u32 %s37, %s41
      %s125 = ssub.s32 %s26, %s45
      %s126 = ssub.s32 %s123, %s124
      %s127 = sor.u32 %s125, %s126
      %p128 = scmp.eq.s32.totalorder %s127, 0
      %s130 = sadd.s32 %s129, 1
      %s131 = scalar_select %p128, %s129, %s130
      %p134 = pneg %p128
      %p135 = scmp.eq.s32.totalorder %s19, 7
      %p136 = por %p134, %p135
      %p137 = scmp.ne.s32.totalorder %s129, %s132
      %p138 = scmp.eq.s32.totalorder %s19, 0
      %p139 = por %p137, %p138
      %p140 = scmp.ne.s32.totalorder %s129, %s132
      %p141 = scmp.eq.s32.totalorder %s24, 7
      %p142 = por %p140, %p141
      %p143 = scmp.ne.s32.totalorder %s132, %s133
      %p144 = scmp.eq.s32.totalorder %s24, 0
      %p145 = por %p143, %p144
      %p146 = scmp.ne.s32.totalorder %s132, %s133
      %p147 = scmp.eq.s32.totalorder %s25, 7
      %p148 = por %p146, %p147
      %p150 = scmp.ne.s32.totalorder %s133, %s149
      %p151 = scmp.eq.s32.totalorder %s25, 0
      %p152 = por %p150, %p151
      %p153 = scmp.le.s32.totalorder 1, %s19
      %p154 = scmp.lt.s32.totalorder %s19, 9
      %p155 = pnand %p153, %p154
      %p156 = pneg %p155
      // Predicated region
      $region9: #{tpu_custom_call.1} parent=5 // pred_check
        _
      $region10: #{tpu_custom_call.1} parent=5 // pred_check_branch
        %158 = sbr.rel (%p155) target = $region12
      $region11: #{tpu_custom_call.1} parent=5 // pred_region
        %s159 = ssub.s32 %s19, 1
        // Predicated region
        $region13: #{tpu_custom_call.1} parent=11 // pred_check
          %p160 = pneg %p59
        $region14: #{tpu_custom_call.1} parent=11 // pred_check_branch
          %162 = sbr.rel (%p160) target = $region16
        $region15: #{tpu_custom_call.1} parent=11 // pred_region
          %164 = vsyncadd [#allocation7], 0
          %s166 = sshll.u32 %s0, 4
          %s167 = int_to_ptr.hbm [resolvable:$true] %s166
          %169 = dma.hbm_to_smem %s167, 16, [#allocation4], [#allocation7]
        $region16: #{tpu_custom_call.1} parent=11 // pred_fallthru
          _
      $region12: #{tpu_custom_call.1} parent=5 // pred_fallthru
        _
      %p170 = scmp.lt.s32.totalorder %s19, 8
      // Predicated region
      $region17: #{tpu_custom_call.1} parent=5 // pred_check
        %p171 = pneg %p170
      $region18: #{tpu_custom_call.1} parent=5 // pred_check_branch
        %173 = sbr.rel (%p171) target = $region20
      $region19: #{tpu_custom_call.1} parent=5 // pred_region
        // Predicated region
        $region21: #{tpu_custom_call.1} parent=19 // pred_check
          %p174 = pneg %p81
        $region22: #{tpu_custom_call.1} parent=19 // pred_check_branch
          %176 = sbr.rel (%p174) target = $region24
        $region23: #{tpu_custom_call.1} parent=19 // pred_region
          %s177 = sand.u32 %s71, 1
          %s178 = scalar_lea.sflag [#allocation5], %s177
          %s179 = sand.u32 %s71, 1
          %s180 = smul.addr %s179, 4
          %s181 = scalar_lea.vmem [#allocation8], %s180
          %183 = vsyncadd %s178, 0
          %s184 = smul.addr %s26, 2
          %s185 = sadd.s32 %s28, %s184
          %s186 = smul.addr %s185, 4
          %s187 = scalar_lea.hbm %s1, %s186
          %s189 = sshll.u32 %s187, 4
          %s190 = int_to_ptr.hbm [resolvable:$true] %s189
          %s191 = sshll.u32 %s181, 4
          %s192 = int_to_ptr.vmem [resolvable:$true] %s191
          %194 = dma.hbm_to_vmem [thread:$0]  %s190, 64, %s192, %s178
        $region24: #{tpu_custom_call.1} parent=19 // pred_fallthru
          _
        // Predicated region
        $region25: #{tpu_custom_call.1} parent=19 // pred_check
          %p195 = pneg %p109
        $region26: #{tpu_custom_call.1} parent=19 // pred_check_branch
          %197 = sbr.rel (%p195) target = $region28
        $region27: #{tpu_custom_call.1} parent=19 // pred_region
          %s198 = sand.u32 %s99, 1
          %s199 = scalar_lea.sflag [#allocation10], %s198
          %s200 = sand.u32 %s99, 1
          %s201 = smul.addr %s200, 4
          %s202 = scalar_lea.vmem [#allocation9], %s201
          %204 = vsyncadd %s199, 0
          %s205 = smul.addr %s26, 2
          %s206 = sadd.s32 %s28, %s205
          %s207 = smul.addr %s206, 4
          %s208 = scalar_lea.hbm %s2, %s207
          %s210 = sshll.u32 %s208, 4
          %s211 = int_to_ptr.hbm [resolvable:$true] %s210
          %s212 = sshll.u32 %s202, 4
          %s213 = int_to_ptr.vmem [resolvable:$true] %s212
          %215 = dma.hbm_to_vmem [thread:$0]  %s211, 64, %s213, %s199
        $region28: #{tpu_custom_call.1} parent=19 // pred_fallthru
          _
      $region20: #{tpu_custom_call.1} parent=5 // pred_fallthru
        _
      %p216 = scmp.le.s32.totalorder 1, %s19
      %p217 = scmp.lt.s32.totalorder %s19, 9
      %p218 = pnand %p216, %p217
      %p219 = pneg %p218
      // Predicated region
      $region29: #{tpu_custom_call.1} parent=5 // pred_check
        _
      $region30: #{tpu_custom_call.1} parent=5 // pred_check_branch
        %221 = sbr.rel (%p218) target = $region32
      $region31: #{tpu_custom_call.1} parent=5 // pred_region
        %s222 = ssub.s32 %s19, 1
        // Predicated region
        $region33: #{tpu_custom_call.1} parent=31 // pred_check
          %p223 = pneg %p59
        $region34: #{tpu_custom_call.1} parent=31 // pred_check_branch
          %225 = sbr.rel (%p223) target = $region36
        $region35: #{tpu_custom_call.1} parent=31 // pred_region
          %227 = dma.done [#allocation7], 16
        $region36: #{tpu_custom_call.1} parent=31 // pred_fallthru
          _
        %s228 = sand.u32 %s74, 1
        %s229 = scalar_lea.sflag [#allocation5], %s228
        %s230 = sand.u32 %s74, 1
        %s231 = smul.addr %s230, 4
        %s232 = scalar_lea.vmem [#allocation8], %s231
        // Predicated region
        $region37: #{tpu_custom_call.1} parent=31 // pred_check
          %p233 = pneg %p87
        $region38: #{tpu_custom_call.1} parent=31 // pred_check_branch
          %235 = sbr.rel (%p233) target = $region40
        $region39: #{tpu_custom_call.1} parent=31 // pred_region
          %237 = dma.done %s229, 64
        $region40: #{tpu_custom_call.1} parent=31 // pred_fallthru
          _
        %s238 = sand.u32 %s102, 1
        %s239 = scalar_lea.sflag [#allocation10], %s238
        %s240 = sand.u32 %s102, 1
        %s241 = smul.addr %s240, 4
        %s242 = scalar_lea.vmem [#allocation9], %s241
        // Predicated region
        $region41: #{tpu_custom_call.1} parent=31 // pred_check
          %p243 = pneg %p115
        $region42: #{tpu_custom_call.1} parent=31 // pred_check_branch
          %245 = sbr.rel (%p243) target = $region44
        $region43: #{tpu_custom_call.1} parent=31 // pred_region
          %247 = dma.done %s239, 64
        $region44: #{tpu_custom_call.1} parent=31 // pred_fallthru
          _
        %248 = sfence
        %p249 = pneg %p59
        %p250 = pneg %p56
        %s251 = sand.u32 %s74, 1
        %s252 = scalar_lea.sflag [#allocation5], %s251
        %s253 = sand.u32 %s74, 1
        %s254 = smul.addr %s253, 4
        %s255 = scalar_lea.vmem [#allocation8], %s254
        %p256 = pneg %p87
        %p257 = pneg %p84
        %s258 = sand.u32 %s102, 1
        %s259 = scalar_lea.sflag [#allocation10], %s258
        %s260 = sand.u32 %s102, 1
        %s261 = smul.addr %s260, 4
        %s262 = scalar_lea.vmem [#allocation9], %s261
        %p263 = pneg %p115
        %p264 = pneg %p112
        %p265 = pneg %p145
        %p266 = pneg %p142
        %s267 = sand.u32 %s132, 1
        %s268 = scalar_lea.sflag [#allocation6], %s267
        %s269 = sand.u32 %s132, 1
        %s270 = smul.addr %s269, 4
        %s271 = scalar_lea.vmem [#allocation11], %s270
        %s272 = smul.u32 %s31, %s30
        %v273 = vld [vmem:[%s232] sm:$0xf]
        %v274 = vld [vmem:[%s242] sm:$0xf]
        %s275 = sld [smem:[#allocation4 + $0x1]]
        %v276 = vstv %s275
        %s277 = sld [smem:[#allocation4 + $0x5]]
        %v278 = vstv %s277
        %v279 = vmul.f32 %v278, %v273
        %v280 = vadd.f32 %v276, %v279
        %s281 = sld [smem:[#allocation4 + $0x15]]
        %v282 = vstv %s281
        %v283 = vmul.f32 %v282, %v274
        %v284 = vadd.f32 %v280, %v283
        %s285 = sld [smem:[#allocation4 + $0x6]]
        %v286 = vstv %s285
        %v287 = vmul.f32 %v286, %v273
        %v289 = vrot.slane %v287, 1
        %v291 = vadd.f32 %v284, %v289
        %s292 = sld [smem:[#allocation4 + $0x16]]
        %v293 = vstv %s292
        %v294 = vmul.f32 %v293, %v274
        %v296 = vrot.slane %v294, 1
        %v298 = vadd.f32 %v291, %v296
        %s299 = sld [smem:[#allocation4 + $0x7]]
        %v300 = vstv %s299
        %v301 = vmul.f32 %v300, %v273
        %v303 = vrot.slane %v301, 2
        %v305 = vadd.f32 %v298, %v303
        %s306 = sld [smem:[#allocation4 + $0x17]]
        %v307 = vstv %s306
        %v308 = vmul.f32 %v307, %v274
        %v310 = vrot.slane %v308, 2
        %v312 = vadd.f32 %v305, %v310
        %s313 = sld [smem:[#allocation4 + $0x8]]
        %v314 = vstv %s313
        %v315 = vmul.f32 %v314, %v273
        %v317 = vrot.slane %v315, 3
        %v319 = vadd.f32 %v312, %v317
        %s320 = sld [smem:[#allocation4 + $0x18]]
        %v321 = vstv %s320
        %v322 = vmul.f32 %v321, %v274
        %v324 = vrot.slane %v322, 3
        %v326 = vadd.f32 %v319, %v324
        %s327 = sld [smem:[#allocation4 + $0x2]]
        %v328 = vstv %s327
        %s329 = sld [smem:[#allocation4 + $0x9]]
        %v330 = vstv %s329
        %v331 = vmul.f32 %v330, %v273
        %v332 = vadd.f32 %v328, %v331
        %s333 = sld [smem:[#allocation4 + $0x19]]
        %v334 = vstv %s333
        %v335 = vmul.f32 %v334, %v274
        %v336 = vadd.f32 %v332, %v335
        %s337 = sld [smem:[#allocation4 + $0xa]]
        %v338 = vstv %s337
        %v339 = vmul.f32 %v338, %v273
        %v341 = vrot.slane %v339, 1
        %v343 = vadd.f32 %v336, %v341
        %s344 = sld [smem:[#allocation4 + $0x1a]]
        %v345 = vstv %s344
        %v346 = vmul.f32 %v345, %v274
        %v348 = vrot.slane %v346, 1
        %v350 = vadd.f32 %v343, %v348
        %s351 = sld [smem:[#allocation4 + $0xb]]
        %v352 = vstv %s351
        %v353 = vmul.f32 %v352, %v273
        %v355 = vrot.slane %v353, 2
        %v357 = vadd.f32 %v350, %v355
        %s358 = sld [smem:[#allocation4 + $0x1b]]
        %v359 = vstv %s358
        %v360 = vmul.f32 %v359, %v274
        %v362 = vrot.slane %v360, 2
        %v364 = vadd.f32 %v357, %v362
        %s365 = sld [smem:[#allocation4 + $0xc]]
        %v366 = vstv %s365
        %v367 = vmul.f32 %v366, %v273
        %v369 = vrot.slane %v367, 3
        %v371 = vadd.f32 %v364, %v369
        %s372 = sld [smem:[#allocation4 + $0x1c]]
        %v373 = vstv %s372
        %v374 = vmul.f32 %v373, %v274
        %v376 = vrot.slane %v374, 3
        %v378 = vadd.f32 %v371, %v376
        %s379 = sld [smem:[#allocation4 + $0x3]]
        %v380 = vstv %s379
        %s381 = sld [smem:[#allocation4 + $0xd]]
        %v382 = vstv %s381
        %v383 = vmul.f32 %v382, %v273
        %v384 = vadd.f32 %v380, %v383
        %s385 = sld [smem:[#allocation4 + $0x1d]]
        %v386 = vstv %s385
        %v387 = vmul.f32 %v386, %v274
        %v388 = vadd.f32 %v384, %v387
        %s389 = sld [smem:[#allocation4 + $0xe]]
        %v390 = vstv %s389
        %v391 = vmul.f32 %v390, %v273
        %v393 = vrot.slane %v391, 1
        %v395 = vadd.f32 %v388, %v393
        %s396 = sld [smem:[#allocation4 + $0x1e]]
        %v397 = vstv %s396
        %v398 = vmul.f32 %v397, %v274
        %v400 = vrot.slane %v398, 1
        %v402 = vadd.f32 %v395, %v400
        %s403 = sld [smem:[#allocation4 + $0xf]]
        %v404 = vstv %s403
        %v405 = vmul.f32 %v404, %v273
        %v407 = vrot.slane %v405, 2
        %v409 = vadd.f32 %v402, %v407
        %s410 = sld [smem:[#allocation4 + $0x1f]]
        %v411 = vstv %s410
        %v412 = vmul.f32 %v411, %v274
        %v414 = vrot.slane %v412, 2
        %v416 = vadd.f32 %v409, %v414
        %s417 = sld [smem:[#allocation4 + $0x10]]
        %v418 = vstv %s417
        %v419 = vmul.f32 %v418, %v273
        %v421 = vrot.slane %v419, 3
        %v423 = vadd.f32 %v416, %v421
        %s424 = sld [smem:[#allocation4 + $0x20]]
        %v425 = vstv %s424
        %v426 = vmul.f32 %v425, %v274
        %v428 = vrot.slane %v426, 3
        %v430 = vadd.f32 %v423, %v428
        %s431 = sld [smem:[#allocation4 + $0x4]]
        %v432 = vstv %s431
        %s433 = sld [smem:[#allocation4 + $0x11]]
        %v434 = vstv %s433
        %v435 = vmul.f32 %v434, %v273
        %v436 = vadd.f32 %v432, %v435
        %s437 = sld [smem:[#allocation4 + $0x21]]
        %v438 = vstv %s437
        %v439 = vmul.f32 %v438, %v274
        %v440 = vadd.f32 %v436, %v439
        %s441 = sld [smem:[#allocation4 + $0x12]]
        %v442 = vstv %s441
        %v443 = vmul.f32 %v442, %v273
        %v445 = vrot.slane %v443, 1
        %v447 = vadd.f32 %v440, %v445
        %s448 = sld [smem:[#allocation4 + $0x22]]
        %v449 = vstv %s448
        %v450 = vmul.f32 %v449, %v274
        %v452 = vrot.slane %v450, 1
        %v454 = vadd.f32 %v447, %v452
        %s455 = sld [smem:[#allocation4 + $0x13]]
        %v456 = vstv %s455
        %v457 = vmul.f32 %v456, %v273
        %v459 = vrot.slane %v457, 2
        %v461 = vadd.f32 %v454, %v459
        %s462 = sld [smem:[#allocation4 + $0x23]]
        %v463 = vstv %s462
        %v464 = vmul.f32 %v463, %v274
        %v466 = vrot.slane %v464, 2
        %v468 = vadd.f32 %v461, %v466
        %s469 = sld [smem:[#allocation4 + $0x14]]
        %v470 = vstv %s469
        %v471 = vmul.f32 %v470, %v273
        %v473 = vrot.slane %v471, 3
        %v475 = vadd.f32 %v468, %v473
        %s476 = sld [smem:[#allocation4 + $0x24]]
        %v477 = vstv %s476
        %v478 = vmul.f32 %v477, %v274
        %v480 = vrot.slane %v478, 3
        %v482 = vadd.f32 %v475, %v480
        %v484 = vrot.slane %v378, 7
        %v487 = vrot.slane %v430, 6
        %v490 = vrot.slane %v482, 5
        %vm492 = vcmask 1040384
        %v493 = vsel %vm492, %v326, %v484
        %vm494 = vcmask 1041408
        %v495 = vsel %vm494, %v493, %v487
        %vm496 = vcmask 1042432
        %v497 = vsel %vm496, %v495, %v490
        %p498 = scmp.eq.s32.totalorder %s30, 0
        %p499 = scmp.eq.s32.totalorder %s31, 0
        %p500 = pnand %p498, %p499
        %p501 = pneg %p500
        // Predicated region
        $region45: #{tpu_custom_call.1} parent=31 // pred_check
          _
        $region46: #{tpu_custom_call.1} parent=31 // pred_check_branch
          %503 = sbr.rel (%p500) target = $region48
        $region47: #{tpu_custom_call.1} parent=31 // pred_region
          %504 = vst [vmem:[#allocation2] sm:$0xf] 0.0
          %505 = vst [vmem:[#allocation3] sm:$0xf] 0.0
        $region48: #{tpu_custom_call.1} parent=31 // pred_fallthru
          _
        // Predicated region
        $region49: #{tpu_custom_call.1} parent=31 // pred_check
          %p506 = pneg %p498
        $region50: #{tpu_custom_call.1} parent=31 // pred_check_branch
          %508 = sbr.rel (%p506) target = $region52
        $region51: #{tpu_custom_call.1} parent=31 // pred_region
          %v509 = vld [vmem:[#allocation2] sm:$0xf]
          %v510 = vadd.f32 %v509, %v497
          %511 = vst [vmem:[#allocation2] sm:$0xf] %v510
          %v512 = vld [vmem:[#allocation3] sm:$0xf]
          %v513 = vmul.f32 %v497, %v497
          %v514 = vadd.f32 %v512, %v513
          %515 = vst [vmem:[#allocation3] sm:$0xf] %v514
        $region52: #{tpu_custom_call.1} parent=31 // pred_fallthru
          _
        %p516 = scmp.eq.s32.totalorder %s30, 1
        // Predicated region
        $region53: #{tpu_custom_call.1} parent=31 // pred_check
          %p517 = pneg %p516
        $region54: #{tpu_custom_call.1} parent=31 // pred_check_branch
          %519 = sbr.rel (%p517) target = $region56
        $region55: #{tpu_custom_call.1} parent=31 // pred_region
          %v520 = vld [vmem:[#allocation2] sm:$0xf]
          %vm521 = vcmask 1043456
          %v522 = vsel %vm521, %v520, 0.0
          %523 = vadd.xlane.f32.xlu0 %v522
          %v524 = vpop.xlane.xlu0 %523
          %v525 = vld [vmem:[#allocation3] sm:$0xf]
          %v526 = vsel %vm521, %v525, 0.0
          %527 = vadd.xlane.f32.xlu0 %v526
          %v528 = vpop.xlane.xlu0 %527
          %v529 = vmul.f32 %v524, 0.00390625
          %v530 = vmul.f32 %v528, 0.00390625
          %v531 = vmul.f32 %v529, %v529
          %v532 = vsub.f32 %v530, %v531
          %v533 = vmax.f32 %v532, 0.0
          %v534 = vadd.f32 %v533, 1e-05
          %v535 = vrsqrt.pop %v534
          %v536 = vmul.f32 %v535, %v534
          %v537 = vmul.f32 %v536, %v535
          %v538 = vmul.f32 0.5, %v537
          %v539 = vsub.f32 1.5, %v538
          %v540 = vmul.f32 %v535, %v539
          %vm541 = vweird.f32 %v534
          %vm542 = vweird.f32 %v535
          %vm543 = vmor %vm541, %vm542
          %v544 = vsel %vm543, %v535, %v540
          %v545 = vsub.f32 %v497, %v529
          %v546 = vmul.f32 %v545, %v544
          %s547 = sld [smem:[#allocation4]]
          %vm548 = vcmp.gt.f32.partialorder %v546, 0.0
          %v549 = vstv %s547
          %v550 = vmul.f32 %v549, %v546
          %v551 = vsel %vm548, %v546, %v550
          %552 = vst [vmem:[%s271] sm:$0xf] %v551
        $region56: #{tpu_custom_call.1} parent=31 // pred_fallthru
          _
        %s553 = sand.u32 %s132, 1
        %s554 = scalar_lea.sflag [#allocation6], %s553
        %s555 = sand.u32 %s132, 1
        %s556 = smul.addr %s555, 4
        %s557 = scalar_lea.vmem [#allocation11], %s556
        // Predicated region
        $region57: #{tpu_custom_call.1} parent=31 // pred_check
          %p558 = pneg %p142
        $region58: #{tpu_custom_call.1} parent=31 // pred_check_branch
          %560 = sbr.rel (%p558) target = $region60
        $region59: #{tpu_custom_call.1} parent=31 // pred_region
          %s561 = smul.u32 %s31, %s30
          %563 = vsyncadd %s554, 0
          %s564 = smul.addr %s29, 2
          %s565 = sadd.s32 %s561, %s564
          %s566 = smul.addr %s565, 4
          %s567 = scalar_lea.hbm %s3, %s566
          %s569 = sshll.u32 %s557, 4
          %s570 = int_to_ptr.vmem [resolvable:$true] %s569
          %s571 = sshll.u32 %s567, 4
          %s572 = int_to_ptr.hbm [resolvable:$true] %s571
          %574 = dma.vmem_to_hbm [thread:$0]  %s570, 64, %s572, %s554
        $region60: #{tpu_custom_call.1} parent=31 // pred_fallthru
          _
      $region32: #{tpu_custom_call.1} parent=5 // pred_fallthru
        _
      %p575 = scmp.le.s32.totalorder 2, %s19
      // Predicated region
      $region61: #{tpu_custom_call.1} parent=5 // pred_check
        %p576 = pneg %p575
      $region62: #{tpu_custom_call.1} parent=5 // pred_check_branch
        %578 = sbr.rel (%p576) target = $region64
      $region63: #{tpu_custom_call.1} parent=5 // pred_region
        %s579 = ssub.s32 %s19, 2
        // Predicated region
        $region65: #{tpu_custom_call.1} parent=63 // pred_check
          %p580 = pneg %p148
        $region66: #{tpu_custom_call.1} parent=63 // pred_check_branch
          %582 = sbr.rel (%p580) target = $region68
        $region67: #{tpu_custom_call.1} parent=63 // pred_region
          %s583 = sand.u32 %s133, 1
          %s584 = scalar_lea.sflag [#allocation6], %s583
          %s585 = sand.u32 %s133, 1
          %s586 = smul.addr %s585, 4
          %s587 = scalar_lea.vmem [#allocation11], %s586
          %589 = dma.done %s584, 64
        $region68: #{tpu_custom_call.1} parent=63 // pred_fallthru
          _
      $region64: #{tpu_custom_call.1} parent=5 // pred_fallthru
        _
    $region6: #{tpu_custom_call.1} parent=1 // loop_footer
      %s23 = sadd.s32 1, %s19
    $region7: #{tpu_custom_call.1} parent=1 // loop_footer_branch
      %18 = sbr.rel target = $region3
    $region8: #{tpu_custom_call.1} parent=1 // loop_exit
      _
    %590 = vsyncpa [#allocation5], 1
    %s591 = scalar_lea.sflag [#allocation5], 1
    %592 = vsyncpa %s591, 1
    %593 = vsyncpa [#allocation10], 1
    %s594 = scalar_lea.sflag [#allocation10], 1
    %595 = vsyncpa %s594, 1
    %596 = vsyncpa [#allocation6], 1
    %s597 = scalar_lea.sflag [#allocation6], 1
    %598 = vsyncpa %s597, 1
    %599 = vsyncpa [#allocation7], 1
    %s600 = scalar_lea.sflag [#allocation7], 1
    %601 = vsyncpa %s600, 1

</llo_original>
